<compile_context>
chip_gen: v6e
topology: v6e:2x2x1
jax: 0.10.0
libtpu: 0.0.40
codegen_flags: <defaults>
</compile_context>

<pallas_src>
import jax
import jax.numpy as jnp
from jax.experimental import pallas as pl
from jax.experimental.pallas import tpu as pltpu

_LANE = 128
# ~4 MiB per block per array; 4 live blocks (input + output, double-buffered)
# => ~16 MiB peak VMEM.
_TARGET_BLOCK_BYTES = 4 * 1024 * 1024
# Explicit scoped-VMEM limit: needed on v5e (16 MiB default), harmless and
# under physical VMEM on v6e (128 MiB) and v7x (64 MiB per TC).
_VMEM_LIMIT_BYTES = 48 * 1024 * 1024
# Below this, a fused XLA elementwise op is strictly faster than a kernel launch.
_SMALL_FAST_PATH_BYTES = 256 * 1024
# Round small odd grids to an even step count (v7x dual-TC balance); for larger
# grids the imbalance is negligible.
_EVEN_GRID_MAX_STEPS = 16


def _hardswish_jnp(x):
    # relu6(x + 3) = clamp(x + 3, 0, 6); multiply by 1/6 (<= 1 ulp vs /6).
    return x * jnp.clip(x + 3.0, 0.0, 6.0) * (1.0 / 6.0)


def _hardswish_kernel(x_ref, o_ref):
    x = x_ref[...]
    o_ref[...] = x * jnp.clip(x + 3.0, 0.0, 6.0) * (1.0 / 6.0)


def _sublane_multiple(dtype) -> int:
    """Second-minor tiling multiple: 8 for 32-bit, 16 for bf16, 32 for 8-bit."""
    bits = jnp.dtype(dtype).itemsize * 8
    return max(8, (32 // bits) * 8)


def _round_up(a: int, b: int) -> int:
    return ((a + b - 1) // b) * b


def _hardswish_pallas_2d(x2d):
    """Runs the Pallas kernel on a lane-dense (rows, lanes) f32/bf16 array."""
    rows, lanes = x2d.shape
    dtype = x2d.dtype
    itemsize = jnp.dtype(dtype).itemsize
    sub = _sublane_multiple(dtype)

    target_rows = max(sub, (_TARGET_BLOCK_BYTES // (itemsize * lanes)) // sub * sub)

    if rows <= 2 * sub:
        # Tiny: a single block equal to the full array dims (exempt from the
        # (8, 128) divisibility rule).
        block_rows = rows
    else:
        # At least 2 blocks (both v7x TensorCores get work), each <= ~4 MiB.
        nblk = max(2, -(-rows // target_rows))
        # Even step count for small grids so the two TCs stay balanced.
        if nblk % 2 == 1 and nblk <= _EVEN_GRID_MAX_STEPS:
            nblk += 1
        block_rows = _round_up(-(-rows // nblk), sub)
        block_rows = max(sub, min(block_rows, _round_up(rows, sub)))

    grid = (pl.cdiv(rows, block_rows),)
    n_elems = rows * lanes

    return pl.pallas_call(
        _hardswish_kernel,
        out_shape=jax.ShapeDtypeStruct((rows, lanes), dtype),
        grid_spec=pltpu.PrefetchScalarGridSpec(
            num_scalar_prefetch=0,
            grid=grid,
            in_specs=[pl.BlockSpec((block_rows, lanes), lambda i: (i, 0))],
            out_specs=pl.BlockSpec((block_rows, lanes), lambda i: (i, 0)),
        ),
        compiler_params=pltpu.CompilerParams(
            dimension_semantics=("parallel",),
            vmem_limit_bytes=_VMEM_LIMIT_BYTES,
            # Fuse the upstream reshape/slice into the operand read instead of
            # materializing an extra HBM copy.
            allow_input_fusion=[True],
        ),
        cost_estimate=pl.CostEstimate(
            flops=5 * n_elems,
            transcendentals=0,
            bytes_accessed=2 * n_elems * itemsize,
        ),
    )(x2d)


def hardswish(x, *, min_pallas_bytes=_SMALL_FAST_PATH_BYTES):
    """hardswish(x) = x * relu6(x + 3) / 6, elementwise.

    Float dtypes only (f32 / bf16); integer inputs are not supported.
    """
    orig_shape = x.shape
    n = x.size
    if n == 0:
        return x
    itemsize = jnp.dtype(x.dtype).itemsize

    # Small-tensor fast path: kernel-launch overhead dominates; a fused XLA
    # elementwise op hits the same 1-read + 1-write roofline.
    if n * itemsize <= min_pallas_bytes:
        return _hardswish_jnp(x)

    flat = x.reshape(-1)

    # Kernel processes the 128-aligned prefix; the (<128-element) tail is done
    # in plain jnp (no whole-array pad / slice passes).
    rem = n % _LANE
    aligned = n - rem
    if aligned == 0:
        return _hardswish_jnp(x)

    # Widest lane-dense last dim (multiple of 128) dividing the prefix length.
    lanes = _LANE
    for cand in (1024, 512, 256):
        if aligned % cand == 0:
            lanes = cand
            break
    rows = aligned // lanes

    out_main = _hardswish_pallas_2d(flat[:aligned].reshape(rows, lanes)).reshape(-1)

    if rem:
        out_tail = _hardswish_jnp(flat[aligned:])
        out_flat = jnp.concatenate([out_main, out_tail])
    else:
        out_flat = out_main
    return out_flat.reshape(orig_shape)


def hardswish_ref(x):
    return x * jnp.clip(x + 3.0, 0.0, 6.0) / 6.0


if __name__ == "__main__":
    key = jax.random.PRNGKey(0)
    # NCHW input, same convention as the PyTorch module.
    x = jax.random.normal(key, (2, 4, 16, 16), dtype=jnp.float32) * 4.0
    ref = hardswish_ref(x)

    # Default call (small tensor -> fused-XLA fast path).
    out_fast = jax.block_until_ready(hardswish(x))
    assert out_fast.shape == x.shape and out_fast.dtype == x.dtype
    assert jnp.allclose(out_fast, ref, atol=1e-6, rtol=1e-5)

    # Force the Pallas kernel path on the same small input.
    out_kernel = jax.block_until_ready(hardswish(x, min_pallas_bytes=0))
    assert out_kernel.shape == x.shape and out_kernel.dtype == x.dtype
    assert jnp.allclose(out_kernel, ref, atol=1e-6, rtol=1e-5)

    # Non-multiple-of-128 size: kernel on the aligned prefix + jnp tail.
    y = jax.random.normal(jax.random.PRNGKey(1), (3, 5, 7, 11), dtype=jnp.float32) * 4.0
    out_y = jax.block_until_ready(hardswish(y, min_pallas_bytes=0))
    assert jnp.allclose(out_y, hardswish_ref(y), atol=1e-6, rtol=1e-5)

    # Multi-block grid with a ragged last block (OOB writes dropped).
    z = jax.random.normal(jax.random.PRNGKey(2), (4, 32, 33, 32), dtype=jnp.float32) * 4.0
    out_z = jax.block_until_ready(hardswish(z, min_pallas_bytes=0))
    assert jnp.allclose(out_z, hardswish_ref(z), atol=1e-6, rtol=1e-5)

    print("KERNEL_OK")
</pallas_src>

<mosaic_0001>
module attributes {stable_mosaic.version = 11 : i64} {
  func.func @_hardswish_kernel(%arg0: i32, %arg1: memref<2x1024xf32, #tpu.memory_space<vmem>>, %arg2: memref<2x1024xf32, #tpu.memory_space<vmem>>) attributes {dimension_semantics = [#tpu.dimension_semantics<parallel>], iteration_bounds = array<i64: 1>, scalar_prefetch = 0 : i64, scratch_operands = 0 : i64, tpu.core_type = #tpu.core_type<tc>, window_params = [{transform_indices = @transform_0, window_bounds = array<i64: 2, 1024>}, {transform_indices = @transform_1, window_bounds = array<i64: 2, 1024>}]} {
    %c0 = arith.constant 0 : index
    %c0_0 = arith.constant 0 : index
    %0 = vector.load %arg1[%c0, %c0_0] : memref<2x1024xf32, #tpu.memory_space<vmem>>, vector<2x1024xf32>
    %cst = arith.constant 3.000000e+00 : f32
    %1 = vector.broadcast %cst : f32 to vector<2x1024xf32>
    %2 = arith.addf %0, %1 : vector<2x1024xf32>
    %cst_1 = arith.constant 0.000000e+00 : f32
    %cst_2 = arith.constant 6.000000e+00 : f32
    %3 = vector.broadcast %cst_1 : f32 to vector<2x1024xf32>
    %4 = arith.maximumf %3, %2 : vector<2x1024xf32>
    %5 = vector.broadcast %cst_2 : f32 to vector<2x1024xf32>
    %6 = arith.minimumf %5, %4 : vector<2x1024xf32>
    %7 = arith.mulf %0, %6 : vector<2x1024xf32>
    %cst_3 = arith.constant 0.166666672 : f32
    %8 = vector.broadcast %cst_3 : f32 to vector<2x1024xf32>
    %9 = arith.mulf %7, %8 : vector<2x1024xf32>
    %c0_4 = arith.constant 0 : index
    %c0_5 = arith.constant 0 : index
    %10 = vector.load %arg2[%c0_4, %c0_5] : memref<2x1024xf32, #tpu.memory_space<vmem>>, vector<2x1024xf32>
    tpu.vector_store %arg2[%c0_4, %c0_5], %9 {strides = array<i32>} : memref<2x1024xf32, #tpu.memory_space<vmem>>, vector<2x1024xf32>,
    return
  }
  func.func @transform_0(%arg0: i32) -> (i32, i32) {
    %c0_i32 = arith.constant 0 : i32
    %c0_i32_0 = arith.constant 0 : i32
    return %arg0, %c0_i32 : i32, i32
  }
  func.func @transform_1(%arg0: i32) -> (i32, i32) {
    %c0_i32 = arith.constant 0 : i32
    %c0_i32_0 = arith.constant 0 : i32
    return %arg0, %c0_i32 : i32, i32
  }
}

</mosaic_0001>

<llo_original>
// kernel: tpu_custom_call.1
$region0: #{tpu_custom_call.1}
  #allocation0 [shape = 'u32[]', space=smem, size = 0x4, offset = 0x4, fixed_abs, tag = 'smem constant byte address 0x4 - core index']
  #allocation1 [shape = 'u32[144,128]{1,0:T(1,128)}', space=vmem, size = 0x12000, scoped, tag = 'internal scratch']
  %s0 = inlined_call_operand.hbm [shape: f32[2,1024], index: 0, kind: input, shape index: {}]
  %s1 = inlined_call_operand.hbm [shape: f32[2,1024], index: 1, kind: output, shape index: {}]
  %s2 = sld [smem:[#allocation0]]
  $region18: #{tpu_custom_call.1} parent=0
    _
  %s4 = ssub.s32 1, %s2
  %s5 = scalar_select 0, %s4, %s2
  $region1: #{tpu_custom_call.1} parent=0
    #allocation2 [shape = 'u8[8192]{0}', space=vmem, size = 0x2000, scoped, tag = 'input window, operand 0, single buffered']
    #allocation3 [shape = 's32[1]{0}', space=sflag, size = 0x4, scoped, tag = 'scoped memory for tpu_custom_call.1']
    #allocation4 [shape = 's32[1]{0}', space=sflag, size = 0x4, scoped, tag = 'scoped memory for tpu_custom_call.1']
    #allocation5 [shape = 'u8[8192]{0}', space=vmem, size = 0x2000, scoped, tag = 'output window, operand 0, single buffered']
    %6 = vsyncpa [#allocation3], 0
    %7 = vsyncpa [#allocation4], 0
    // Predicated region
    $region2: #{tpu_custom_call.1} parent=1 // pred_check
      _
    $region3: #{tpu_custom_call.1} parent=1 // pred_check_branch
      %9 = sbr.rel (0) target = $region5
    $region4: #{tpu_custom_call.1} parent=1 // pred_region
      %s11 = ssub.s32 256, 256
      %12 = vsyncadd [#allocation3], %s11
      %s14 = sshll.u32 [#allocation2], 4
      %s15 = int_to_ptr.vmem [resolvable:$true] %s14
      %17 = dma.hbm_to_vmem [thread:$0]  %s0, 256, %s15, [#allocation3]
    $region5: #{tpu_custom_call.1} parent=1 // pred_fallthru
      _
    // Predicated region
    $region6: #{tpu_custom_call.1} parent=1 // pred_check
      _
    $region7: #{tpu_custom_call.1} parent=1 // pred_check_branch
      %19 = sbr.rel (0) target = $region9
    $region8: #{tpu_custom_call.1} parent=1 // pred_region
      %20 = dma.done [#allocation3], 256
    $region9: #{tpu_custom_call.1} parent=1 // pred_fallthru
      _
    %v21 = vld [vmem:[#allocation2] sm:$0xff]
    %v22 = vld [vmem:[#allocation2 + $0x8] sm:$0xff]
    %v23 = vadd.f32 %v21, 3.0
    %v24 = vadd.f32 %v22, 3.0
    %v25 = vmax.f32 %v23, 0.0
    %v26 = vmax.f32 %v24, 0.0
    %v27 = vmin.f32 %v25, 6.0
    %v28 = vmin.f32 %v26, 6.0
    %v29 = vmul.f32 %v21, %v27
    %v30 = vmul.f32 %v22, %v28
    %v31 = vmul.f32 %v29, 0.16666667
    %v32 = vmul.f32 %v30, 0.16666667
    %33 = vst [vmem:[#allocation5] sm:$0xff] %v31
    %34 = vst [vmem:[#allocation5 + $0x8] sm:$0xff] %v32
    // Predicated region
    $region10: #{tpu_custom_call.1} parent=1 // pred_check
      _
    $region11: #{tpu_custom_call.1} parent=1 // pred_check_branch
      %36 = sbr.rel (0) target = $region13
    $region12: #{tpu_custom_call.1} parent=1 // pred_region
      %s38 = ssub.s32 256, 256
      %39 = vsyncadd [#allocation4], %s38
      %s41 = sshll.u32 [#allocation5], 4
      %s42 = int_to_ptr.vmem [resolvable:$true] %s41
      %44 = dma.vmem_to_hbm [thread:$0]  %s42, 256, %s1, [#allocation4]
    $region13: #{tpu_custom_call.1} parent=1 // pred_fallthru
      _
    // Predicated region
    $region14: #{tpu_custom_call.1} parent=1 // pred_check
      _
    $region15: #{tpu_custom_call.1} parent=1 // pred_check_branch
      %46 = sbr.rel (0) target = $region17
    $region16: #{tpu_custom_call.1} parent=1 // pred_region
      %47 = dma.done [#allocation4], 256
    $region17: #{tpu_custom_call.1} parent=1 // pred_fallthru
      _
    %48 = vsyncpa [#allocation3], 1
    %49 = vsyncpa [#allocation4], 1

</llo_original>
